<compile_context>
chip_gen: v7x
topology: tpu7x:2x2x1
jax: 0.10.0
libtpu: 0.0.40
codegen_flags: <defaults>
</compile_context>

<pallas_src>
import functools
import math

import jax
import jax.numpy as jnp
from jax.experimental import pallas as pl
from jax.experimental.pallas import tpu as pltpu

LOG_STD_MIN = -20.0
LOG_STD_MAX = 2.0
_HALF_LOG_2PI = 0.5 * math.log(2.0 * math.pi)
_LOG2 = math.log(2.0)

# ~512 KiB (f32) per input tile -> ~4-5 MiB total with double buffering,
# comfortably inside v7x's 32 MiB scoped VMEM while big enough to sit near the
# HBM roofline on v5e/v6e.
_TILE_BYTES_PER_ARRAY = 1 << 19


# ----------------------------------------------------------------------------
# Literal spec: Scalar.forward() — returns the scalar parameter.
# ----------------------------------------------------------------------------
def _scalar_kernel(c_ref, out_ref):
    out_ref[...] = c_ref[...]


def scalar_forward(constant):
    """Pallas equivalent of Scalar.forward(): pass the scalar parameter through."""
    c = jnp.asarray(constant, jnp.float32).reshape(1, 1)
    out = pl.pallas_call(
        _scalar_kernel,
        out_shape=jax.ShapeDtypeStruct((1, 1), jnp.float32),
    )(c)
    return out[0, 0]


# ----------------------------------------------------------------------------
# ReparameterizedTanhGaussian forward (the reviewed kernel), lane-dense layout.
# Kernel-side layout: mean/log_std/eps tiles are [A, TB]  (A on sublanes,
# batch tile on lanes).  Outputs: action [A, TB], log_prob [1, TB].
# ----------------------------------------------------------------------------
def _tanh_gaussian_kernel(mean_ref, log_std_ref, eps_ref,
                          action_ref, logp_ref,
                          *, deterministic: bool, no_tanh: bool):
    mean = mean_ref[...].astype(jnp.float32)
    log_std = jnp.clip(log_std_ref[...].astype(jnp.float32),
                       LOG_STD_MIN, LOG_STD_MAX)
    std = jnp.exp(log_std)

    if deterministic:
        # action = tanh(mean); Normal(mean,std).log_prob(mean) -> z == 0.
        pre_tanh = mean
        normal_lp = -log_std - _HALF_LOG_2PI
    else:
        # rsample(): pre = mean + std * eps, so (pre - mean)/std == eps exactly.
        eps = eps_ref[...].astype(jnp.float32)
        pre_tanh = mean + std * eps
        normal_lp = -0.5 * (eps * eps) - log_std - _HALF_LOG_2PI

    if no_tanh:
        action = pre_tanh
        lp = normal_lp
    else:
        # Shared exponential: e = exp(-2|x|).
        e = jnp.exp(-2.0 * jnp.abs(pre_tanh))
        log1pe = jnp.log1p(e)
        # softplus(-2x) = max(-2x, 0) + log1p(exp(-|2x|))
        softplus_neg2x = jnp.maximum(-2.0 * pre_tanh, 0.0) + log1pe
        # PyTorch TanhTransform: log|d tanh/dx| = 2*(log2 - x - softplus(-2x)).
        log_det = 2.0 * (_LOG2 - pre_tanh - softplus_neg2x)
        # tanh(x) = sign(x) * (1 - e) / (1 + e); approx EUP reciprocal + one
        # Newton refinement (VPU ops are free here).
        denom = 1.0 + e
        r = pl.reciprocal(denom, approx=True)
        r = r * (2.0 - denom * r)
        action = jnp.sign(pre_tanh) * (1.0 - e) * r
        lp = normal_lp - log_det

    action_ref[...] = action.astype(action_ref.dtype)
    # Reduce over the action (sublane) axis -> lane-dense [1, TB] row.
    logp_ref[...] = jnp.sum(lp, axis=0, keepdims=True).astype(logp_ref.dtype)


def reparam_tanh_gaussian_forward(mean, log_std, eps,
                                  deterministic=False, no_tanh=False,
                                  block_b=None):
    """mean/log_std/eps: [B, A].  Returns (action [B, A], log_prob [B])."""
    B, A = mean.shape
    out_dtype = mean.dtype

    # Lane-dense layout: action dim -> sublanes, batch -> 128-wide lanes.
    mean_t = mean.T
    log_std_t = log_std.T
    eps_t = eps.T

    if block_b is None:
        # VMEM-budgeted tile (compute footprint is f32).
        block_b = max(128, _TILE_BYTES_PER_ARRAY // (A * 4))

    if B <= block_b:
        TB = B                     # single block == full array dims (allowed)
        Bp = B
    else:
        TB = max(128, (block_b // 128) * 128)   # lane tiles: multiples of 128
        Bp = pl.cdiv(B, TB) * TB

    if Bp != B:
        pad = ((0, 0), (0, Bp - B))
        mean_t = jnp.pad(mean_t, pad)
        log_std_t = jnp.pad(log_std_t, pad)
        eps_t = jnp.pad(eps_t, pad)

    grid = (Bp // TB,)
    kernel = functools.partial(_tanh_gaussian_kernel,
                               deterministic=deterministic, no_tanh=no_tanh)
    in_spec = pl.BlockSpec((A, TB), lambda i: (0, i))

    action_t, logp = pl.pallas_call(
        kernel,
        out_shape=(jax.ShapeDtypeStruct((A, Bp), out_dtype),
                   jax.ShapeDtypeStruct((1, Bp), jnp.float32)),
        grid=grid,
        in_specs=[in_spec, in_spec, in_spec],
        out_specs=(pl.BlockSpec((A, TB), lambda i: (0, i)),
                   pl.BlockSpec((1, TB), lambda i: (0, i))),
        compiler_params=pltpu.CompilerParams(
            dimension_semantics=("parallel",)),
    )(mean_t, log_std_t, eps_t)

    action = action_t[:, :B].T
    log_prob = logp[0, :B]
    return action, log_prob


# ----------------------------------------------------------------------------
# Pure-JAX reference mirroring the PyTorch module.
# ----------------------------------------------------------------------------
def _reference_forward(mean, log_std, eps, deterministic=False, no_tanh=False):
    log_std = jnp.clip(log_std, LOG_STD_MIN, LOG_STD_MAX)
    std = jnp.exp(log_std)
    pre = mean if deterministic else mean + std * eps
    normal_lp = -0.5 * ((pre - mean) / std) ** 2 - log_std - _HALF_LOG_2PI
    if no_tanh:
        return pre, jnp.sum(normal_lp, axis=-1)
    action = jnp.tanh(pre)
    log_det = 2.0 * (_LOG2 - pre - jax.nn.softplus(-2.0 * pre))
    return action, jnp.sum(normal_lp - log_det, axis=-1)


if __name__ == "__main__":
    # --- literal spec module: Scalar ---
    c = jax.block_until_ready(scalar_forward(2.5))
    assert jnp.allclose(c, 2.5)

    # --- tanh-gaussian policy head ---
    base_key = jax.random.PRNGKey(0)

    def make_inputs(B, A, dtype=jnp.float32):
        k1, k2, k3 = jax.random.split(jax.random.fold_in(base_key, B * 131 + A), 3)
        mean = jax.random.normal(k1, (B, A), dtype=jnp.float32)
        log_std = jax.random.normal(k2, (B, A), dtype=jnp.float32) * 0.5 - 1.0
        eps = jax.random.normal(k3, (B, A), dtype=jnp.float32)
        return mean.astype(dtype), log_std.astype(dtype), eps.astype(dtype)

    # 1) Small shape (single block).
    B, A = 4, 8
    mean, log_std, eps = make_inputs(B, A)
    act, lp = jax.block_until_ready(
        reparam_tanh_gaussian_forward(mean, log_std, eps))
    ra, rlp = _reference_forward(mean, log_std, eps)
    assert act.shape == (B, A) and lp.shape == (B,)
    assert jnp.allclose(act, ra, atol=1e-4, rtol=1e-4)
    assert jnp.allclose(lp, rlp, atol=1e-4, rtol=1e-4)

    # 2) Tiled batch: grid of 3 steps over 128-lane tiles.
    B = 384
    mean, log_std, eps = make_inputs(B, A)
    act, lp = jax.block_until_ready(
        reparam_tanh_gaussian_forward(mean, log_std, eps, block_b=128))
    ra, rlp = _reference_forward(mean, log_std, eps)
    assert jnp.allclose(act, ra, atol=1e-4, rtol=1e-4)
    assert jnp.allclose(lp, rlp, atol=1e-4, rtol=1e-4)

    # 3) Ragged batch (padded to the tile, results sliced back).
    B = 200
    mean, log_std, eps = make_inputs(B, A)
    act, lp = jax.block_until_ready(
        reparam_tanh_gaussian_forward(mean, log_std, eps, block_b=128))
    ra, rlp = _reference_forward(mean, log_std, eps)
    assert act.shape == (B, A) and lp.shape == (B,)
    assert jnp.allclose(act, ra, atol=1e-4, rtol=1e-4)
    assert jnp.allclose(lp, rlp, atol=1e-4, rtol=1e-4)

    # 4) bf16 I/O (compute stays f32 inside the kernel).
    B = 64
    mean16, log_std16, eps16 = make_inputs(B, A, dtype=jnp.bfloat16)
    act, lp = jax.block_until_ready(
        reparam_tanh_gaussian_forward(mean16, log_std16, eps16))
    ra, rlp = _reference_forward(mean16.astype(jnp.float32),
                                 log_std16.astype(jnp.float32),
                                 eps16.astype(jnp.float32))
    assert act.dtype == jnp.bfloat16 and lp.dtype == jnp.float32
    assert jnp.allclose(act.astype(jnp.float32), ra, atol=1e-2)
    assert jnp.allclose(lp, rlp, atol=1e-3, rtol=1e-3)

    # 5) Deterministic path.
    B, A = 8, 8
    mean, log_std, eps = make_inputs(B, A)
    act, lp = jax.block_until_ready(
        reparam_tanh_gaussian_forward(mean, log_std, eps, deterministic=True))
    ra, rlp = _reference_forward(mean, log_std, eps, deterministic=True)
    assert jnp.allclose(act, ra, atol=1e-4, rtol=1e-4)
    assert jnp.allclose(lp, rlp, atol=1e-4, rtol=1e-4)

    print("KERNEL_OK")
</pallas_src>

<mosaic_0001>
module attributes {stable_mosaic.version = 11 : i64} {
  func.func @_scalar_kernel(%arg0: memref<1x1xf32, #tpu.memory_space<vmem>>, %arg1: memref<1x1xf32, #tpu.memory_space<vmem>>) attributes {dimension_semantics = [], scalar_prefetch = 0 : i64, scratch_operands = 0 : i64, tpu.core_type = #tpu.core_type<tc>} {
    %c0 = arith.constant 0 : index
    %c0_0 = arith.constant 0 : index
    %0 = vector.load %arg0[%c0, %c0_0] : memref<1x1xf32, #tpu.memory_space<vmem>>, vector<1x1xf32>
    %c0_1 = arith.constant 0 : index
    %c0_2 = arith.constant 0 : index
    %1 = vector.load %arg1[%c0_1, %c0_2] : memref<1x1xf32, #tpu.memory_space<vmem>>, vector<1x1xf32>
    tpu.vector_store %arg1[%c0_1, %c0_2], %0 {strides = array<i32>} : memref<1x1xf32, #tpu.memory_space<vmem>>, vector<1x1xf32>,
    return
  }
}

</mosaic_0001>

<llo_original>
// kernel: tpu_custom_call.1
$region0: #{tpu_custom_call.1}
  #allocation0 [shape = 'u32[]', space=smem, size = 0x4, offset = 0x4, fixed_abs, tag = 'smem constant byte address 0x4 - core index']
  #allocation1 [shape = 'u32[144,128]{1,0:T(1,128)}', space=vmem, size = 0x12000, scoped, tag = 'internal scratch']
  #allocation2 [shape = 'f32[1,1]{1,0:T(1,128)S(1)}', space=vmem, size = 0x200, scoped, tag = 'scoped memory for tpu_custom_call.1']
  %s0 = inlined_call_operand.<no memory space> [shape: f32[1,1], index: 0, kind: input, shape index: {}]
  %s1 = inlined_call_operand.hbm [shape: f32[1,1], index: 1, kind: output, shape index: {}]
  %s2 = sld [smem:[#allocation0]]
  $region14: #{tpu_custom_call.1} parent=0
    _
  %s4 = ssub.s32 1, %s2
  %s5 = scalar_select 0, %s4, %s2
  %v6 = vstv %s0
  %7 = vst [vmem:[#allocation2] sm:$0x1] %v6
  $region1: #{tpu_custom_call.1} parent=0
    #allocation3 [shape = 'u8[512]{0}', space=vmem, size = 0x400, scoped, tag = 'output window, operand 0, single buffered']
    #allocation4 [shape = 's32[1]{0}', space=sflag, size = 0x4, scoped, tag = 'scoped memory for tpu_custom_call.1']
    %8 = vsyncpa [#allocation4], 0
    // Predicated region
    $region2: #{tpu_custom_call.1} parent=1 // pred_check
      _
    $region3: #{tpu_custom_call.1} parent=1 // pred_check_branch
      %10 = sbr.rel (0) target = $region5
    $region4: #{tpu_custom_call.1} parent=1 // pred_region
      _
    $region5: #{tpu_custom_call.1} parent=1 // pred_fallthru
      _
    %v11 = vld [vmem:[#allocation2] sm:$0x1]
    %vm12 = vcmask 0
    %13 = vst.msk [vmem:[#allocation3] sm:$0x1] %vm12, %v11
    // Predicated region
    $region6: #{tpu_custom_call.1} parent=1 // pred_check
      _
    $region7: #{tpu_custom_call.1} parent=1 // pred_check_branch
      %15 = sbr.rel (0) target = $region9
    $region8: #{tpu_custom_call.1} parent=1 // pred_region
      %s17 = ssub.s32 16, 16
      %18 = vsyncadd [#allocation4], %s17
      %s20 = sshll.u32 [#allocation3], 4
      %s21 = int_to_ptr.vmem [resolvable:$true] %s20
      %23 = dma.vmem_to_hbm [thread:$0]  %s21, 16, %s1, [#allocation4]
    $region9: #{tpu_custom_call.1} parent=1 // pred_fallthru
      _
    // Predicated region
    $region10: #{tpu_custom_call.1} parent=1 // pred_check
      _
    $region11: #{tpu_custom_call.1} parent=1 // pred_check_branch
      %25 = sbr.rel (0) target = $region13
    $region12: #{tpu_custom_call.1} parent=1 // pred_region
      %26 = dma.done [#allocation4], 16
    $region13: #{tpu_custom_call.1} parent=1 // pred_fallthru
      _
    %27 = vsyncpa [#allocation4], 1

</llo_original>
